<compile_context>
chip_gen: v7x
topology: tpu7x:2x2x1
jax: 0.10.0
libtpu: 0.0.40
codegen_flags: <defaults>
</compile_context>

<pallas_src>
import functools

import jax
import jax.numpy as jnp
from jax.experimental import pallas as pl
from jax.experimental.pallas import tpu as pltpu

NUM_TRANSFORMS = 4
BRIGHTNESS = 0.2
CONTRAST = 1.5


def _segment_reverse(x, seg_w):
    """Reverse every aligned `seg_w`-wide segment along the last (lane) axis.

    log2(seg_w) butterfly stages of "swap adjacent m-wide blocks inside each
    2m-wide block", built only from static rolls + iota masks + selects
    (no MXU, no gather, no lax.rev).  Requires seg_w to be a power of two and
    the last-axis length to be a multiple of seg_w (true for the H*W
    flattening used below).
    """
    lane = jax.lax.broadcasted_iota(jnp.int32, x.shape, dimension=x.ndim - 1)
    m = 1
    while m < seg_w:
        take_right = (lane & (2 * m - 1)) < m          # first half of 2m block
        x = jnp.where(take_right,
                      jnp.roll(x, -m, axis=-1),        # -> x[i + m]
                      jnp.roll(x, m, axis=-1))         # -> x[i - m]
        m *= 2
    return x


def _random_apply_kernel(gate_ref, affine_ref, x_ref, o_ref, *, seg_w):
    # gate_ref:   SMEM int32 (1,)  -- 1 means "apply the horizontal flip"
    # affine_ref: SMEM f32   (2,)  -- fused (scale, bias) for t1/t2/t3
    # x_ref/o_ref: VMEM (blk_rows, H*W) lane-dense slab of the NCHW image
    x = x_ref[...].astype(jnp.float32)

    # t0: horizontal flip -- skipped entirely (scalar branch) when gate is 0.
    x = jax.lax.cond(gate_ref[0] > 0,
                     lambda v: _segment_reverse(v, seg_w),
                     lambda v: v,
                     x)

    # t1 + t2 + t3 fused into a single FMA; single store per tile.
    o_ref[...] = (x * affine_ref[0] + affine_ref[1]).astype(o_ref.dtype)


@functools.partial(jax.jit, static_argnames=("p",))
def random_apply_each(img, key, p):
    """img: (N, C, H, W).  key: PRNG key.  p: per-transform apply probability."""
    N, C, H, W = img.shape
    assert W & (W - 1) == 0, "in-kernel flip requires power-of-two W"
    # TODO(synk): non-power-of-two W would need a gather-based lane reverse.

    # One uniform draw per transform (mirrors `p > torch.rand(1)` per step).
    u = jax.random.uniform(key, (NUM_TRANSFORMS,), dtype=jnp.float32)
    gates = u < jnp.float32(p)

    # Fuse t1 (x+B), t2 (x*C), t3 (-x) into out = scale*x + bias.
    scale = jnp.where(gates[2], CONTRAST, 1.0) * jnp.where(gates[3], -1.0, 1.0)
    bias = scale * jnp.where(gates[1], BRIGHTNESS, 0.0)
    affine = jnp.stack([scale, bias]).astype(jnp.float32)
    gate_flip = gates[0].astype(jnp.int32).reshape(1)

    # Lane-dense 2-D view: rows = N*C, lanes = H*W.  W-wide flip segments stay
    # W-aligned inside each row, so the in-kernel segment reverse is exact.
    rows, lanes = N * C, H * W
    x2d = img.reshape(rows, lanes)

    # Block sizing: ~2 MiB per block => 2 pipeline buffers x (in + out) ~ 8 MiB
    # VMEM across all generations (v5e 16 MiB scoped default, v7x 64 MiB phys).
    itemsize = jnp.dtype(img.dtype).itemsize
    target_bytes = 2 * 1024 * 1024
    blk_rows = max(1, target_bytes // (lanes * itemsize))
    if blk_rows >= rows:
        blk_rows = rows
    elif rows >= 8:
        blk_rows = max(8, (blk_rows // 8) * 8)
    # TODO(synk): planes larger than ~256K f32 elements per row would need
    # additional W-aligned blocking along the lane axis to respect the budget.
    grid = (pl.cdiv(rows, blk_rows),)

    grid_spec = pltpu.PrefetchScalarGridSpec(
        num_scalar_prefetch=2,                        # gate_flip, affine -> SMEM
        grid=grid,
        in_specs=[pl.BlockSpec((blk_rows, lanes), lambda i, g, a: (i, 0))],
        out_specs=pl.BlockSpec((blk_rows, lanes), lambda i, g, a: (i, 0)),
    )

    out2d = pl.pallas_call(
        functools.partial(_random_apply_kernel, seg_w=W),
        out_shape=jax.ShapeDtypeStruct((rows, lanes), img.dtype),
        grid_spec=grid_spec,
        compiler_params=pltpu.CompilerParams(
            dimension_semantics=("parallel",),        # shards across TCs on v7x
            vmem_limit_bytes=32 * 1024 * 1024,
        ),
    )(gate_flip, affine, x2d)

    return out2d.reshape(N, C, H, W)


def _reference(img, key, p):
    """Pure-JAX reference of the same gated transform pipeline."""
    u = jax.random.uniform(key, (NUM_TRANSFORMS,), dtype=jnp.float32)
    gates = u < jnp.float32(p)
    x = img
    x = jnp.where(gates[0], x[..., ::-1], x)
    x = jnp.where(gates[1], x + BRIGHTNESS, x)
    x = jnp.where(gates[2], x * CONTRAST, x)
    x = jnp.where(gates[3], -x, x)
    return x


if __name__ == "__main__":
    key = jax.random.PRNGKey(0)
    k_img, k_gate = jax.random.split(key)

    N, C, H, W = 2, 4, 16, 16
    img = jax.random.normal(k_img, (N, C, H, W), dtype=jnp.float32)
    p = 0.5

    out = random_apply_each(img, k_gate, p)
    out = jax.block_until_ready(out)

    ref = _reference(img, k_gate, p)
    assert out.shape == (N, C, H, W) and out.dtype == jnp.float32
    assert jnp.allclose(out, ref, atol=1e-5, rtol=1e-5)

    print("KERNEL_OK")
</pallas_src>

<mosaic_0001>
module attributes {stable_mosaic.version = 11 : i64} {
  func.func @_random_apply_kernel(%arg0: i32, %arg1: memref<1xi32, #tpu.memory_space<smem>>, %arg2: memref<2xf32, #tpu.memory_space<smem>>, %arg3: memref<8x256xf32, #tpu.memory_space<vmem>>, %arg4: memref<8x256xf32, #tpu.memory_space<vmem>>) attributes {dimension_semantics = [#tpu.dimension_semantics<parallel>], iteration_bounds = array<i64: 1>, scalar_prefetch = 2 : i64, scratch_operands = 0 : i64, tpu.core_type = #tpu.core_type<tc>, window_params = [{transform_indices = @transform_0, window_bounds = array<i64: 8, 256>}, {transform_indices = @transform_1, window_bounds = array<i64: 8, 256>}]} {
    %c0 = arith.constant 0 : index
    %c0_0 = arith.constant 0 : index
    %0 = vector.load %arg3[%c0, %c0_0] : memref<8x256xf32, #tpu.memory_space<vmem>>, vector<8x256xf32>
    %c0_1 = arith.constant 0 : index
    %1 = memref.load %arg1[%c0_1] : memref<1xi32, #tpu.memory_space<smem>>
    %c0_i32 = arith.constant 0 : i32
    %2 = arith.cmpi sgt, %1, %c0_i32 : i32
    %3 = arith.extui %2 : i1 to i32
    %c0_i32_2 = arith.constant 0 : i32
    %4 = arith.cmpi ne, %3, %c0_i32_2 : i32
    %5 = scf.if %4 -> (vector<8x256xf32>) {
      %13 = tpu.iota {dimensions = array<i32: 1>} : vector<8x256xi32>
      %c1_i32 = arith.constant 1 : i32
      %14 = vector.broadcast %c1_i32 : i32 to vector<8x256xi32>
      %15 = arith.andi %13, %14 : vector<8x256xi32>
      %c1_i32_6 = arith.constant 1 : i32
      %16 = vector.broadcast %c1_i32_6 : i32 to vector<8x256xi32>
      %17 = arith.cmpi slt, %15, %16 : vector<8x256xi32>
      %18 = vector.extract_strided_slice %0 {offsets = [0, 1], sizes = [8, 255], strides = [1, 1]} : vector<8x256xf32> to vector<8x255xf32>
      %19 = vector.extract_strided_slice %0 {offsets = [0, 0], sizes = [8, 1], strides = [1, 1]} : vector<8x256xf32> to vector<8x1xf32>
      %20 = tpu.concatenate %18, %19 in 1 : vector<8x255xf32>, vector<8x1xf32> -> vector<8x256xf32>
      %21 = vector.extract_strided_slice %0 {offsets = [0, 255], sizes = [8, 1], strides = [1, 1]} : vector<8x256xf32> to vector<8x1xf32>
      %22 = vector.extract_strided_slice %0 {offsets = [0, 0], sizes = [8, 255], strides = [1, 1]} : vector<8x256xf32> to vector<8x255xf32>
      %23 = tpu.concatenate %21, %22 in 1 : vector<8x1xf32>, vector<8x255xf32> -> vector<8x256xf32>
      %24 = arith.select %17, %20, %23 : vector<8x256xi1>, vector<8x256xf32>
      %c3_i32 = arith.constant 3 : i32
      %25 = vector.broadcast %c3_i32 : i32 to vector<8x256xi32>
      %26 = arith.andi %13, %25 : vector<8x256xi32>
      %c2_i32 = arith.constant 2 : i32
      %27 = vector.broadcast %c2_i32 : i32 to vector<8x256xi32>
      %28 = arith.cmpi slt, %26, %27 : vector<8x256xi32>
      %29 = vector.extract_strided_slice %24 {offsets = [0, 2], sizes = [8, 254], strides = [1, 1]} : vector<8x256xf32> to vector<8x254xf32>
      %30 = vector.extract_strided_slice %24 {offsets = [0, 0], sizes = [8, 2], strides = [1, 1]} : vector<8x256xf32> to vector<8x2xf32>
      %31 = tpu.concatenate %29, %30 in 1 : vector<8x254xf32>, vector<8x2xf32> -> vector<8x256xf32>
      %32 = vector.extract_strided_slice %24 {offsets = [0, 254], sizes = [8, 2], strides = [1, 1]} : vector<8x256xf32> to vector<8x2xf32>
      %33 = vector.extract_strided_slice %24 {offsets = [0, 0], sizes = [8, 254], strides = [1, 1]} : vector<8x256xf32> to vector<8x254xf32>
      %34 = tpu.concatenate %32, %33 in 1 : vector<8x2xf32>, vector<8x254xf32> -> vector<8x256xf32>
      %35 = arith.select %28, %31, %34 : vector<8x256xi1>, vector<8x256xf32>
      %c7_i32 = arith.constant 7 : i32
      %36 = vector.broadcast %c7_i32 : i32 to vector<8x256xi32>
      %37 = arith.andi %13, %36 : vector<8x256xi32>
      %c4_i32 = arith.constant 4 : i32
      %38 = vector.broadcast %c4_i32 : i32 to vector<8x256xi32>
      %39 = arith.cmpi slt, %37, %38 : vector<8x256xi32>
      %40 = vector.extract_strided_slice %35 {offsets = [0, 4], sizes = [8, 252], strides = [1, 1]} : vector<8x256xf32> to vector<8x252xf32>
      %41 = vector.extract_strided_slice %35 {offsets = [0, 0], sizes = [8, 4], strides = [1, 1]} : vector<8x256xf32> to vector<8x4xf32>
      %42 = tpu.concatenate %40, %41 in 1 : vector<8x252xf32>, vector<8x4xf32> -> vector<8x256xf32>
      %43 = vector.extract_strided_slice %35 {offsets = [0, 252], sizes = [8, 4], strides = [1, 1]} : vector<8x256xf32> to vector<8x4xf32>
      %44 = vector.extract_strided_slice %35 {offsets = [0, 0], sizes = [8, 252], strides = [1, 1]} : vector<8x256xf32> to vector<8x252xf32>
      %45 = tpu.concatenate %43, %44 in 1 : vector<8x4xf32>, vector<8x252xf32> -> vector<8x256xf32>
      %46 = arith.select %39, %42, %45 : vector<8x256xi1>, vector<8x256xf32>
      %c15_i32 = arith.constant 15 : i32
      %47 = vector.broadcast %c15_i32 : i32 to vector<8x256xi32>
      %48 = arith.andi %13, %47 : vector<8x256xi32>
      %c8_i32 = arith.constant 8 : i32
      %49 = vector.broadcast %c8_i32 : i32 to vector<8x256xi32>
      %50 = arith.cmpi slt, %48, %49 : vector<8x256xi32>
      %51 = vector.extract_strided_slice %46 {offsets = [0, 8], sizes = [8, 248], strides = [1, 1]} : vector<8x256xf32> to vector<8x248xf32>
      %52 = vector.extract_strided_slice %46 {offsets = [0, 0], sizes = [8, 8], strides = [1, 1]} : vector<8x256xf32> to vector<8x8xf32>
      %53 = tpu.concatenate %51, %52 in 1 : vector<8x248xf32>, vector<8x8xf32> -> vector<8x256xf32>
      %54 = vector.extract_strided_slice %46 {offsets = [0, 248], sizes = [8, 8], strides = [1, 1]} : vector<8x256xf32> to vector<8x8xf32>
      %55 = vector.extract_strided_slice %46 {offsets = [0, 0], sizes = [8, 248], strides = [1, 1]} : vector<8x256xf32> to vector<8x248xf32>
      %56 = tpu.concatenate %54, %55 in 1 : vector<8x8xf32>, vector<8x248xf32> -> vector<8x256xf32>
      %57 = arith.select %50, %53, %56 : vector<8x256xi1>, vector<8x256xf32>
      scf.yield %57 : vector<8x256xf32>
    } else {
      scf.yield %0 : vector<8x256xf32>
    }
    %c0_3 = arith.constant 0 : index
    %6 = memref.load %arg2[%c0_3] : memref<2xf32, #tpu.memory_space<smem>>
    %7 = vector.broadcast %6 : f32 to vector<8x256xf32>
    %8 = arith.mulf %5, %7 : vector<8x256xf32>
    %c1 = arith.constant 1 : index
    %9 = memref.load %arg2[%c1] : memref<2xf32, #tpu.memory_space<smem>>
    %10 = vector.broadcast %9 : f32 to vector<8x256xf32>
    %11 = arith.addf %8, %10 : vector<8x256xf32>
    %c0_4 = arith.constant 0 : index
    %c0_5 = arith.constant 0 : index
    %12 = vector.load %arg4[%c0_4, %c0_5] : memref<8x256xf32, #tpu.memory_space<vmem>>, vector<8x256xf32>
    tpu.vector_store %arg4[%c0_4, %c0_5], %11 {strides = array<i32>} : memref<8x256xf32, #tpu.memory_space<vmem>>, vector<8x256xf32>,
    return
  }
  func.func @transform_0(%arg0: i32, %arg1: memref<1xi32, #tpu.memory_space<smem>>, %arg2: memref<2xf32, #tpu.memory_space<smem>>) -> (i32, i32) {
    %c0_i32 = arith.constant 0 : i32
    %c0_i32_0 = arith.constant 0 : i32
    return %arg0, %c0_i32 : i32, i32
  }
  func.func @transform_1(%arg0: i32, %arg1: memref<1xi32, #tpu.memory_space<smem>>, %arg2: memref<2xf32, #tpu.memory_space<smem>>) -> (i32, i32) {
    %c0_i32 = arith.constant 0 : i32
    %c0_i32_0 = arith.constant 0 : i32
    return %arg0, %c0_i32 : i32, i32
  }
}

</mosaic_0001>

<llo_original>
// kernel: random_apply_each.1
$region0: #{random_apply_each.1}
  #allocation0 [shape = 'u32[]', space=smem, size = 0x4, offset = 0x4, fixed_abs, tag = 'smem constant byte address 0x4 - core index']
  #allocation1 [shape = 'u32[144,128]{1,0:T(1,128)}', space=vmem, size = 0x12000, scoped, tag = 'internal scratch']
  #allocation2 [shape = 's32[1]{0}', space=sflag, size = 0x4, scoped, tag = 'scoped memory for random_apply_each.1']
  #allocation3 [shape = 's32[1]{0:T(128)S(6)}', space=smem, size = 0x200, scoped, tag = 'prefetched SMEM operand 0']
  #allocation4 [shape = 'u8[512]{0}', space=smem, size = 0x200, scoped, tag = 'prefetched SMEM operand 1']
  %s0 = inlined_call_operand.<no memory space> [shape: s32[1], index: 0, kind: input, shape index: {}]
  %s1 = inlined_call_operand.vmem [shape: f32[2], index: 1, kind: input, shape index: {}]
  %s2 = inlined_call_operand.vmem [shape: f32[8,256], index: 2, kind: input, shape index: {}]
  %s3 = inlined_call_operand.vmem [shape: f32[8,256], index: 3, kind: output, shape index: {}]
  %s4 = sld [smem:[#allocation0]]
  $region22: #{random_apply_each.1} parent=0
    _
  %s6 = ssub.s32 1, %s4
  %s7 = scalar_select 0, %s6, %s4
  %8 = sst [smem:[#allocation3]] %s0
  %s9 = sshll.u32 %s1, 4
  %s10 = int_to_ptr.vmem [resolvable:$true] %s9
  %12 = dma.vmem_to_smem %s10, 16, [#allocation4], [#allocation2]
  %13 = dma.done [#allocation2], 16
  %14 = sfence
  // Predicated region
  $region2: #{random_apply_each.1} parent=0 // pred_check
    _
  $region3: #{random_apply_each.1} parent=0 // pred_check_branch
    %16 = sbr.rel (0) target = $region5
  $region4: #{random_apply_each.1} parent=0 // pred_region
    _
  $region5: #{random_apply_each.1} parent=0 // pred_fallthru
    _
  %v17 = vld [vmem:[%s2] sm:$0xff]
  %v18 = vld [vmem:[%s2 + $0x8] sm:$0xff]
  %s19 = sld [smem:[#allocation3]]
  %p20 = scmp.gt.s32.totalorder %s19, 0
  // Predicated region
  $region6: #{random_apply_each.1} parent=0 // pred_check
    %p21 = pneg %p20
  $region7: #{random_apply_each.1} parent=0 // pred_check_branch
    %23 = sbr.rel (%p21) target = $region9
  $region8: #{random_apply_each.1} parent=0 // pred_region
    %v24 = vlaneseq
    %v25 = vand.u32 %v24, 127
    %v26 = vadd.s32 %v25, 128
    %v27 = vand.u32 %v25, 1
    %v28 = vand.u32 %v26, 1
    %vm29 = vcmp.lt.s32.totalorder %v27, 1
    %vm30 = vcmp.lt.s32.totalorder %v28, 1
    %33 = vrot.lane.b32.xlu0 %v17, 127
    %v34 = vpop.permute.xlu0 %33
    %35 = vrot.lane.b32.xlu0 %v18, 127
    %v36 = vpop.permute.xlu0 %35
    %vm37 = vcmask 1039360
    %v38 = vsel %vm37, %v34, %v36
    %v42 = vsel %vm37, %v36, %v34
    %43 = vrot.lane.b32.xlu0 %v18, 1
    %v44 = vpop.permute.xlu0 %43
    %46 = vrot.lane.b32.xlu0 %v17, 1
    %v47 = vpop.permute.xlu0 %46
    %vm48 = vcmask 7168
    %v49 = vsel %vm48, %v47, %v44
    %v52 = vsel %vm48, %v44, %v47
    %v53 = vsel %vm29, %v38, %v52
    %v54 = vsel %vm30, %v42, %v49
    %v55 = vand.u32 %v25, 3
    %v56 = vand.u32 %v26, 3
    %vm57 = vcmp.lt.s32.totalorder %v55, 2
    %vm58 = vcmp.lt.s32.totalorder %v56, 2
    %61 = vrot.lane.b32.xlu0 %v53, 126
    %v62 = vpop.permute.xlu0 %61
    %63 = vrot.lane.b32.xlu0 %v54, 126
    %v64 = vpop.permute.xlu0 %63
    %vm65 = vcmask 1031168
    %v66 = vsel %vm65, %v62, %v64
    %v70 = vsel %vm65, %v64, %v62
    %71 = vrot.lane.b32.xlu0 %v54, 2
    %v72 = vpop.permute.xlu0 %71
    %74 = vrot.lane.b32.xlu0 %v53, 2
    %v75 = vpop.permute.xlu0 %74
    %vm76 = vcmask 15360
    %v77 = vsel %vm76, %v75, %v72
    %v80 = vsel %vm76, %v72, %v75
    %v81 = vsel %vm57, %v66, %v80
    %v82 = vsel %vm58, %v70, %v77
    %v83 = vand.u32 %v25, 7
    %v84 = vand.u32 %v26, 7
    %vm85 = vcmp.lt.s32.totalorder %v83, 4
    %vm86 = vcmp.lt.s32.totalorder %v84, 4
    %89 = vrot.lane.b32.xlu0 %v81, 124
    %v90 = vpop.permute.xlu0 %89
    %91 = vrot.lane.b32.xlu0 %v82, 124
    %v92 = vpop.permute.xlu0 %91
    %vm93 = vcmask 1014784
    %v94 = vsel %vm93, %v90, %v92
    %v98 = vsel %vm93, %v92, %v90
    %99 = vrot.lane.b32.xlu0 %v82, 4
    %v100 = vpop.permute.xlu0 %99
    %102 = vrot.lane.b32.xlu0 %v81, 4
    %v103 = vpop.permute.xlu0 %102
    %vm104 = vcmask 31744
    %v105 = vsel %vm104, %v103, %v100
    %v108 = vsel %vm104, %v100, %v103
    %v109 = vsel %vm85, %v94, %v108
    %v110 = vsel %vm86, %v98, %v105
    %v111 = vand.u32 %v25, 15
    %v112 = vand.u32 %v26, 15
    %vm113 = vcmp.lt.s32.totalorder %v111, 8
    %vm114 = vcmp.lt.s32.totalorder %v112, 8
    %117 = vrot.lane.b32.xlu0 %v109, 120
    %v118 = vpop.permute.xlu0 %117
    %119 = vrot.lane.b32.xlu0 %v110, 120
    %v120 = vpop.permute.xlu0 %119
    %vm121 = vcmask 982016
    %v122 = vsel %vm121, %v118, %v120
    %v126 = vsel %vm121, %v120, %v118
    %127 = vrot.lane.b32.xlu0 %v110, 8
    %v128 = vpop.permute.xlu0 %127
    %130 = vrot.lane.b32.xlu0 %v109, 8
    %v131 = vpop.permute.xlu0 %130
    %vm132 = vcmask 64512
    %v133 = vsel %vm132, %v131, %v128
    %v136 = vsel %vm132, %v128, %v131
    %v137 = vsel %vm113, %v122, %v136
    %v138 = vsel %vm114, %v126, %v133
  $region9: #{random_apply_each.1} parent=0 // pred_fallthru
    %v139 = vphi 0, %v137
    %v140 = vphi 0, %v138
  %p141 = pneg %p20
  // Predicated region
  $region10: #{random_apply_each.1} parent=0 // pred_check
    _
  $region11: #{random_apply_each.1} parent=0 // pred_check_branch
    %143 = sbr.rel (%p20) target = $region13
  $region12: #{random_apply_each.1} parent=0 // pred_region
    _
  $region13: #{random_apply_each.1} parent=0 // pred_fallthru
    %v144 = vphi %v139, %v17
    %v145 = vphi %v140, %v18
  %s146 = sld [smem:[#allocation4]]
  %v147 = vstv %s146
  %v148 = vmul.f32 %v144, %v147
  %v149 = vmul.f32 %v145, %v147
  %s150 = sld [smem:[#allocation4 + $0x1]]
  %v151 = vstv %s150
  %v152 = vadd.f32 %v148, %v151
  %v153 = vadd.f32 %v149, %v151
  %154 = vst [vmem:[%s3] sm:$0xff] %v152
  %155 = vst [vmem:[%s3 + $0x8] sm:$0xff] %v153
  // Predicated region
  $region14: #{random_apply_each.1} parent=0 // pred_check
    _
  $region15: #{random_apply_each.1} parent=0 // pred_check_branch
    %157 = sbr.rel (0) target = $region17
  $region16: #{random_apply_each.1} parent=0 // pred_region
    _
  $region17: #{random_apply_each.1} parent=0 // pred_fallthru
    _
  // Predicated region
  $region18: #{random_apply_each.1} parent=0 // pred_check
    _
  $region19: #{random_apply_each.1} parent=0 // pred_check_branch
    %159 = sbr.rel (0) target = $region21
  $region20: #{random_apply_each.1} parent=0 // pred_region
    _
  $region21: #{random_apply_each.1} parent=0 // pred_fallthru
    _

</llo_original>
